<compile_context>
chip_gen: v5e
topology: v5e:2x2
jax: 0.10.0
libtpu: 0.0.40
codegen_flags: <defaults>
</compile_context>

<pallas_src>
import math

import jax
import jax.numpy as jnp
from jax.experimental import pallas as pl
from jax.experimental.pallas import tpu as pltpu


# ---------------- kernels ----------------

def qnetwork_kernel_fused(s_ref, a_ref,
                          w14_ref, b14_ref,
                          w25_ref, b25_ref,
                          w36_ref, b36_ref,
                          q_ref):
    """Both heads fused end-to-end (for 256-wide MXUs: v6e / v7x)."""
    H = w25_ref.shape[0] // 2

    s = s_ref[...].astype(jnp.bfloat16)
    a = a_ref[...].astype(jnp.bfloat16)
    xu = jnp.concatenate([s, a], axis=-1)              # (TB, d_in) bf16, VMEM only

    # ---- layer 1, both heads, fused over K: (TB, 2H) ----
    h14 = jnp.dot(xu, w14_ref[...], preferred_element_type=jnp.float32) + b14_ref[...]
    h14 = jnp.maximum(h14, 0.0).astype(jnp.bfloat16)

    # ---- layer 2, both heads, block-diagonal [[W2,0],[0,W5]]: (TB, 2H) ----
    h25 = jnp.dot(h14, w25_ref[...], preferred_element_type=jnp.float32) + b25_ref[...]
    h25 = jnp.maximum(h25, 0.0)

    # ---- final N=1 projections: one VPU multiply + two lane reduces ----
    prod = h25 * w36_ref[...]                          # (TB, 2H) * (1, 2H)
    q1 = jnp.sum(prod[:, :H], axis=-1, keepdims=True)  # (TB, 1)
    q2 = jnp.sum(prod[:, H:], axis=-1, keepdims=True)  # (TB, 1)

    q_ref[...] = jnp.concatenate([q1, q2], axis=1) + b36_ref[...]


def qnetwork_kernel_split(s_ref, a_ref,
                          w14_ref, b14_ref,
                          w2_ref, b2_ref, w5_ref, b5_ref,
                          w36_ref, b36_ref,
                          q_ref):
    """Layer 2 kept as two (TB,H)@(H,H) dots (right shape for 128x128 MXUs: <= v5e)."""
    H = w2_ref.shape[0]

    s = s_ref[...].astype(jnp.bfloat16)
    a = a_ref[...].astype(jnp.bfloat16)
    xu = jnp.concatenate([s, a], axis=-1)              # (TB, d_in) bf16

    # ---- layer 1, both heads fused, K fused: (TB, 2H) ----
    h14 = jnp.dot(xu, w14_ref[...], preferred_element_type=jnp.float32) + b14_ref[...]
    h14 = jnp.maximum(h14, 0.0)
    h1 = h14[:, :H].astype(jnp.bfloat16)
    h4 = h14[:, H:].astype(jnp.bfloat16)

    # ---- layer 2 per head ----
    h2 = jnp.maximum(
        jnp.dot(h1, w2_ref[...], preferred_element_type=jnp.float32) + b2_ref[...], 0.0)
    h5 = jnp.maximum(
        jnp.dot(h4, w5_ref[...], preferred_element_type=jnp.float32) + b5_ref[...], 0.0)

    # ---- final N=1 projections on the VPU ----
    w3_row = w36_ref[0:1, :]                           # (1, H)
    w6_row = w36_ref[1:2, :]                           # (1, H)
    q1 = jnp.sum(h2 * w3_row, axis=-1, keepdims=True)
    q2 = jnp.sum(h5 * w6_row, axis=-1, keepdims=True)

    q_ref[...] = jnp.concatenate([q1, q2], axis=1) + b36_ref[...]


# ---------------- wrapper ----------------

def _mxu_is_256_wide():
    """True on chips with a 256-wide MXU (v6e / v7x); False on 128x128 MXUs (<= v5)."""
    try:
        kind = jax.devices()[0].device_kind.lower()
    except Exception:
        return True
    return ("v6" in kind) or ("v7" in kind)


def qnetwork_forward(state, action, packed, fuse_l2):
    """state: (B, num_inputs), action: (B, num_actions) -> (q1, q2), each (B, 1)."""
    B, num_inputs = state.shape
    num_actions = action.shape[1]

    # batch tile: full batch when small, 512 otherwise (footprint stays at a few MiB)
    TB = B if B <= 512 else 512
    grid = (pl.cdiv(B, TB),)

    resident = lambda arr: pl.BlockSpec(arr.shape, lambda i: (0, 0))
    kernel = qnetwork_kernel_fused if fuse_l2 else qnetwork_kernel_split

    q = pl.pallas_call(
        kernel,
        out_shape=jax.ShapeDtypeStruct((B, 2), jnp.float32),
        grid=grid,
        in_specs=[
            pl.BlockSpec((TB, num_inputs), lambda i: (i, 0)),    # state
            pl.BlockSpec((TB, num_actions), lambda i: (i, 0)),   # action
        ] + [resident(w) for w in packed],
        out_specs=pl.BlockSpec((TB, 2), lambda i: (i, 0)),
        compiler_params=pltpu.CompilerParams(
            dimension_semantics=("parallel",),
            vmem_limit_bytes=32 * 1024 * 1024),   # only matters if TB is pushed past ~512 on v5e
    )(state, action, *packed)

    return q[:, 0:1], q[:, 1:2]


# ---------------- parameters (match PyTorch QNetwork init) ----------------

def xavier_uniform(key, fan_in, fan_out):
    # matches torch.nn.init.xavier_uniform_ with gain=1 (stored transposed: (in, out))
    bound = math.sqrt(6.0 / (fan_in + fan_out))
    return jax.random.uniform(key, (fan_in, fan_out),
                              dtype=jnp.float32, minval=-bound, maxval=bound)


def init_params(key, num_inputs, num_actions, hidden_dim):
    d_in = num_inputs + num_actions
    keys = jax.random.split(key, 6)
    w1 = xavier_uniform(keys[0], d_in, hidden_dim)
    b1 = jnp.zeros((1, hidden_dim), jnp.float32)
    w2 = xavier_uniform(keys[1], hidden_dim, hidden_dim)
    b2 = jnp.zeros((1, hidden_dim), jnp.float32)
    w3 = xavier_uniform(keys[2], hidden_dim, 1)
    b3 = jnp.zeros((1, 1), jnp.float32)
    w4 = xavier_uniform(keys[3], d_in, hidden_dim)
    b4 = jnp.zeros((1, hidden_dim), jnp.float32)
    w5 = xavier_uniform(keys[4], hidden_dim, hidden_dim)
    b5 = jnp.zeros((1, hidden_dim), jnp.float32)
    w6 = xavier_uniform(keys[5], hidden_dim, 1)
    b6 = jnp.zeros((1, 1), jnp.float32)
    return (w1, b1, w2, b2, w3, b3, w4, b4, w5, b5, w6, b6)


def pack_params(params, fuse_l2):
    """Pack/fuse weights for the kernel: bf16 matmul weights, fused heads.

    Note: H should be a multiple of 128 (true for hidden_dim=128/256) for
    lane-aligned slicing; other H is still correct but triggers relayouts.
    """
    (w1, b1, w2, b2, w3, b3, w4, b4, w5, b5, w6, b6) = params
    H = w2.shape[0]

    # layer 1: fused across heads and over K (xu is concatenated in-kernel)
    w14 = jnp.concatenate([w1, w4], axis=1).astype(jnp.bfloat16)    # (d_in, 2H)
    b14 = jnp.concatenate([b1, b4], axis=1)                          # (1, 2H) f32
    b36 = jnp.concatenate([b3, b6], axis=1)                          # (1, 2)  f32

    if fuse_l2:
        # layer 2: block-diagonal [[W2, 0], [0, W5]] -> one (2H, 2H) matmul
        zeros = jnp.zeros((H, H), jnp.float32)
        w25 = jnp.concatenate(
            [jnp.concatenate([w2, zeros], axis=1),
             jnp.concatenate([zeros, w5], axis=1)], axis=0).astype(jnp.bfloat16)  # (2H, 2H)
        b25 = jnp.concatenate([b2, b5], axis=1)                      # (1, 2H) f32
        w36 = jnp.concatenate([w3, w6], axis=0).T                    # (1, 2H) f32 row
        return (w14, b14, w25, b25, w36, b36)
    else:
        w2b = w2.astype(jnp.bfloat16)
        w5b = w5.astype(jnp.bfloat16)
        w36 = jnp.stack([w3[:, 0], w6[:, 0]], axis=0)                # (2, H) f32 rows
        return (w14, b14, w2b, b2, w5b, b5, w36, b36)


# ---------------- references ----------------

def reference_forward_f32(state, action, params):
    """Exact PyTorch-module semantics in f32."""
    (w1, b1, w2, b2, w3, b3, w4, b4, w5, b5, w6, b6) = params
    xu = jnp.concatenate([state, action], axis=1)
    x1 = jnp.maximum(xu @ w1 + b1, 0.0)
    x2 = jnp.maximum(x1 @ w2 + b2, 0.0)
    x3 = x2 @ w3 + b3
    x4 = jnp.maximum(xu @ w4 + b4, 0.0)
    x5 = jnp.maximum(x4 @ w5 + b5, 0.0)
    x6 = x5 @ w6 + b6
    return x3, x6


def reference_forward_bf16(state, action, params):
    """Mirrors the kernel's bf16-operand / f32-accumulate math (tight check)."""
    (w1, b1, w2, b2, w3, b3, w4, b4, w5, b5, w6, b6) = params
    bf = lambda x: x.astype(jnp.bfloat16)
    xu = jnp.concatenate([bf(state), bf(action)], axis=1)
    h1 = jnp.maximum(
        jnp.dot(xu, bf(w1), preferred_element_type=jnp.float32) + b1, 0.0)
    h2 = jnp.maximum(
        jnp.dot(bf(h1), bf(w2), preferred_element_type=jnp.float32) + b2, 0.0)
    q1 = jnp.sum(h2 * w3[:, 0][None, :], axis=-1, keepdims=True) + b3
    h4 = jnp.maximum(
        jnp.dot(xu, bf(w4), preferred_element_type=jnp.float32) + b4, 0.0)
    h5 = jnp.maximum(
        jnp.dot(bf(h4), bf(w5), preferred_element_type=jnp.float32) + b5, 0.0)
    q2 = jnp.sum(h5 * w6[:, 0][None, :], axis=-1, keepdims=True) + b6
    return q1, q2


if __name__ == "__main__":
    num_inputs, num_actions, hidden_dim = 24, 8, 256
    batch = 8

    key = jax.random.PRNGKey(0)
    k_state, k_action, k_params = jax.random.split(key, 3)

    state = jax.random.normal(k_state, (batch, num_inputs), dtype=jnp.float32)
    action = jax.random.normal(k_action, (batch, num_actions), dtype=jnp.float32)
    params = init_params(k_params, num_inputs, num_actions, hidden_dim)

    t1, t2 = reference_forward_bf16(state, action, params)   # mirrors kernel math
    r1, r2 = reference_forward_f32(state, action, params)    # exact module semantics

    fuse_auto = _mxu_is_256_wide()   # production choice: fused layer 2 on v6e/v7x only
    # Validate both code paths regardless of the chip we happen to run on.
    for fuse_l2 in (fuse_auto, not fuse_auto):
        packed = pack_params(params, fuse_l2)
        q1, q2 = qnetwork_forward(state, action, packed, fuse_l2)
        jax.block_until_ready((q1, q2))
        assert q1.shape == (batch, 1) and q2.shape == (batch, 1)

        # tight check against the bf16/f32-accumulate reference
        assert jnp.allclose(q1, t1, atol=1e-3, rtol=1e-3)
        assert jnp.allclose(q2, t2, atol=1e-3, rtol=1e-3)

        # loose check against exact f32 module semantics (bf16 quantization slack)
        assert jnp.allclose(q1, r1, atol=1e-1, rtol=1e-1)
        assert jnp.allclose(q2, r2, atol=1e-1, rtol=1e-1)

    print("KERNEL_OK")
</pallas_src>

<mosaic_0001>
module attributes {stable_mosaic.version = 11 : i64} {
  func.func @qnetwork_kernel_split(%arg0: i32, %arg1: memref<8x24xf32, #tpu.memory_space<vmem>>, %arg2: memref<8x8xf32, #tpu.memory_space<vmem>>, %arg3: memref<32x512xbf16, #tpu.memory_space<vmem>>, %arg4: memref<1x512xf32, #tpu.memory_space<vmem>>, %arg5: memref<256x256xbf16, #tpu.memory_space<vmem>>, %arg6: memref<1x256xf32, #tpu.memory_space<vmem>>, %arg7: memref<256x256xbf16, #tpu.memory_space<vmem>>, %arg8: memref<1x256xf32, #tpu.memory_space<vmem>>, %arg9: memref<2x256xf32, #tpu.memory_space<vmem>>, %arg10: memref<1x2xf32, #tpu.memory_space<vmem>>, %arg11: memref<8x2xf32, #tpu.memory_space<vmem>>) attributes {dimension_semantics = [#tpu.dimension_semantics<parallel>], iteration_bounds = array<i64: 1>, scalar_prefetch = 0 : i64, scratch_operands = 0 : i64, tpu.core_type = #tpu.core_type<tc>, window_params = [{transform_indices = @transform_0, window_bounds = array<i64: 8, 24>}, {transform_indices = @transform_1, window_bounds = array<i64: 8, 8>}, {pipeline_mode = #tpu.pipeline_mode<synchronous>, transform_indices = @transform_2, window_bounds = array<i64: 32, 512>}, {pipeline_mode = #tpu.pipeline_mode<synchronous>, transform_indices = @transform_3, window_bounds = array<i64: 1, 512>}, {pipeline_mode = #tpu.pipeline_mode<synchronous>, transform_indices = @transform_4, window_bounds = array<i64: 256, 256>}, {pipeline_mode = #tpu.pipeline_mode<synchronous>, transform_indices = @transform_5, window_bounds = array<i64: 1, 256>}, {pipeline_mode = #tpu.pipeline_mode<synchronous>, transform_indices = @transform_6, window_bounds = array<i64: 256, 256>}, {pipeline_mode = #tpu.pipeline_mode<synchronous>, transform_indices = @transform_7, window_bounds = array<i64: 1, 256>}, {pipeline_mode = #tpu.pipeline_mode<synchronous>, transform_indices = @transform_8, window_bounds = array<i64: 2, 256>}, {pipeline_mode = #tpu.pipeline_mode<synchronous>, transform_indices = @transform_9, window_bounds = array<i64: 1, 2>}, {transform_indices = @transform_10, window_bounds = array<i64: 8, 2>}]} {
    %c0 = arith.constant 0 : index
    %c0_0 = arith.constant 0 : index
    %0 = vector.load %arg1[%c0, %c0_0] : memref<8x24xf32, #tpu.memory_space<vmem>>, vector<8x24xf32>
    %1 = arith.truncf %0 : vector<8x24xf32> to vector<8x24xbf16>
    %c0_1 = arith.constant 0 : index
    %c0_2 = arith.constant 0 : index
    %2 = vector.load %arg2[%c0_1, %c0_2] : memref<8x8xf32, #tpu.memory_space<vmem>>, vector<8x8xf32>
    %3 = arith.truncf %2 : vector<8x8xf32> to vector<8x8xbf16>
    %4 = tpu.concatenate %1, %3 in 1 : vector<8x24xbf16>, vector<8x8xbf16> -> vector<8x32xbf16>
    %c0_3 = arith.constant 0 : index
    %c0_4 = arith.constant 0 : index
    %5 = vector.load %arg3[%c0_3, %c0_4] : memref<32x512xbf16, #tpu.memory_space<vmem>>, vector<32x512xbf16>
    %cst = arith.constant dense<0.000000e+00> : vector<8x512xf32>
    %6 = tpu.matmul %4, %5, %cst {dimension_numbers = #tpu.dot_dimension_numbers<[1], [0], [0], [1], [0, 0, 1, 1], [], []>} : vector<8x32xbf16>, vector<32x512xbf16>, vector<8x512xf32> -> vector<8x512xf32>
    %c0_5 = arith.constant 0 : index
    %c0_6 = arith.constant 0 : index
    %7 = vector.load %arg4[%c0_5, %c0_6] : memref<1x512xf32, #tpu.memory_space<vmem>>, vector<1x512xf32>
    %8 = vector.broadcast %7 : vector<1x512xf32> to vector<8x512xf32>
    %9 = arith.addf %6, %8 : vector<8x512xf32>
    %cst_7 = arith.constant 0.000000e+00 : f32
    %10 = vector.broadcast %cst_7 : f32 to vector<8x512xf32>
    %11 = arith.maximumf %9, %10 : vector<8x512xf32>
    %12 = vector.extract_strided_slice %11 {offsets = [0, 0], sizes = [8, 256], strides = [1, 1]} : vector<8x512xf32> to vector<8x256xf32>
    %13 = arith.truncf %12 : vector<8x256xf32> to vector<8x256xbf16>
    %14 = vector.extract_strided_slice %11 {offsets = [0, 256], sizes = [8, 256], strides = [1, 1]} : vector<8x512xf32> to vector<8x256xf32>
    %15 = arith.truncf %14 : vector<8x256xf32> to vector<8x256xbf16>
    %c0_8 = arith.constant 0 : index
    %c0_9 = arith.constant 0 : index
    %16 = vector.load %arg5[%c0_8, %c0_9] : memref<256x256xbf16, #tpu.memory_space<vmem>>, vector<256x256xbf16>
    %cst_10 = arith.constant dense<0.000000e+00> : vector<8x256xf32>
    %17 = tpu.matmul %13, %16, %cst_10 {dimension_numbers = #tpu.dot_dimension_numbers<[1], [0], [0], [1], [0, 0, 1, 1], [], []>} : vector<8x256xbf16>, vector<256x256xbf16>, vector<8x256xf32> -> vector<8x256xf32>
    %c0_11 = arith.constant 0 : index
    %c0_12 = arith.constant 0 : index
    %18 = vector.load %arg6[%c0_11, %c0_12] : memref<1x256xf32, #tpu.memory_space<vmem>>, vector<1x256xf32>
    %19 = vector.broadcast %18 : vector<1x256xf32> to vector<8x256xf32>
    %20 = arith.addf %17, %19 : vector<8x256xf32>
    %cst_13 = arith.constant 0.000000e+00 : f32
    %21 = vector.broadcast %cst_13 : f32 to vector<8x256xf32>
    %22 = arith.maximumf %20, %21 : vector<8x256xf32>
    %c0_14 = arith.constant 0 : index
    %c0_15 = arith.constant 0 : index
    %23 = vector.load %arg7[%c0_14, %c0_15] : memref<256x256xbf16, #tpu.memory_space<vmem>>, vector<256x256xbf16>
    %cst_16 = arith.constant dense<0.000000e+00> : vector<8x256xf32>
    %24 = tpu.matmul %15, %23, %cst_16 {dimension_numbers = #tpu.dot_dimension_numbers<[1], [0], [0], [1], [0, 0, 1, 1], [], []>} : vector<8x256xbf16>, vector<256x256xbf16>, vector<8x256xf32> -> vector<8x256xf32>
    %c0_17 = arith.constant 0 : index
    %c0_18 = arith.constant 0 : index
    %25 = vector.load %arg8[%c0_17, %c0_18] : memref<1x256xf32, #tpu.memory_space<vmem>>, vector<1x256xf32>
    %26 = vector.broadcast %25 : vector<1x256xf32> to vector<8x256xf32>
    %27 = arith.addf %24, %26 : vector<8x256xf32>
    %cst_19 = arith.constant 0.000000e+00 : f32
    %28 = vector.broadcast %cst_19 : f32 to vector<8x256xf32>
    %29 = arith.maximumf %27, %28 : vector<8x256xf32>
    %c0_20 = arith.constant 0 : index
    %c0_21 = arith.constant 0 : index
    %30 = vector.load %arg9[%c0_20, %c0_21] : memref<2x256xf32, #tpu.memory_space<vmem>>, vector<1x256xf32>
    %c1 = arith.constant 1 : index
    %c0_22 = arith.constant 0 : index
    %31 = vector.load %arg9[%c1, %c0_22] : memref<2x256xf32, #tpu.memory_space<vmem>>, vector<1x256xf32>
    %32 = vector.broadcast %30 : vector<1x256xf32> to vector<8x256xf32>
    %33 = arith.mulf %22, %32 : vector<8x256xf32>
    %cst_23 = arith.constant dense<0.000000e+00> : vector<8xf32>
    %34 = vector.multi_reduction <add>, %33, %cst_23 [1] : vector<8x256xf32> to vector<8xf32>
    %35 = vector.shape_cast %34 : vector<8xf32> to vector<8x1xf32>
    %36 = vector.broadcast %31 : vector<1x256xf32> to vector<8x256xf32>
    %37 = arith.mulf %29, %36 : vector<8x256xf32>
    %cst_24 = arith.constant dense<0.000000e+00> : vector<8xf32>
    %38 = vector.multi_reduction <add>, %37, %cst_24 [1] : vector<8x256xf32> to vector<8xf32>
    %39 = vector.shape_cast %38 : vector<8xf32> to vector<8x1xf32>
    %40 = tpu.concatenate %35, %39 in 1 : vector<8x1xf32>, vector<8x1xf32> -> vector<8x2xf32>
    %c0_25 = arith.constant 0 : index
    %c0_26 = arith.constant 0 : index
    %41 = vector.load %arg10[%c0_25, %c0_26] : memref<1x2xf32, #tpu.memory_space<vmem>>, vector<1x2xf32>
    %42 = vector.broadcast %41 : vector<1x2xf32> to vector<8x2xf32>
    %43 = arith.addf %40, %42 : vector<8x2xf32>
    %c0_27 = arith.constant 0 : index
    %c0_28 = arith.constant 0 : index
    %44 = vector.load %arg11[%c0_27, %c0_28] : memref<8x2xf32, #tpu.memory_space<vmem>>, vector<8x2xf32>
    tpu.vector_store %arg11[%c0_27, %c0_28], %43 {strides = array<i32>} : memref<8x2xf32, #tpu.memory_space<vmem>>, vector<8x2xf32>,
    return
  }
  func.func @transform_0(%arg0: i32) -> (i32, i32) {
    %c0_i32 = arith.constant 0 : i32
    %c0_i32_0 = arith.constant 0 : i32
    return %arg0, %c0_i32 : i32, i32
  }
  func.func @transform_1(%arg0: i32) -> (i32, i32) {
    %c0_i32 = arith.constant 0 : i32
    %c0_i32_0 = arith.constant 0 : i32
    return %arg0, %c0_i32 : i32, i32
  }
  func.func @transform_2(%arg0: i32) -> (i32, i32) {
    %c0_i32 = arith.constant 0 : i32
    %c0_i32_0 = arith.constant 0 : i32
    %c0_i32_1 = arith.constant 0 : i32
    return %c0_i32, %c0_i32_0 : i32, i32
  }
  func.func @transform_3(%arg0: i32) -> (i32, i32) {
    %c0_i32 = arith.constant 0 : i32
    %c0_i32_0 = arith.constant 0 : i32
    %c0_i32_1 = arith.constant 0 : i32
    return %c0_i32, %c0_i32_0 : i32, i32
  }
  func.func @transform_4(%arg0: i32) -> (i32, i32) {
    %c0_i32 = arith.constant 0 : i32
    %c0_i32_0 = arith.constant 0 : i32
    %c0_i32_1 = arith.constant 0 : i32
    return %c0_i32, %c0_i32_0 : i32, i32
  }
  func.func @transform_5(%arg0: i32) -> (i32, i32) {
    %c0_i32 = arith.constant 0 : i32
    %c0_i32_0 = arith.constant 0 : i32
    %c0_i32_1 = arith.constant 0 : i32
    return %c0_i32, %c0_i32_0 : i32, i32
  }
  func.func @transform_6(%arg0: i32) -> (i32, i32) {
    %c0_i32 = arith.constant 0 : i32
    %c0_i32_0 = arith.constant 0 : i32
    %c0_i32_1 = arith.constant 0 : i32
    return %c0_i32, %c0_i32_0 : i32, i32
  }
  func.func @transform_7(%arg0: i32) -> (i32, i32) {
    %c0_i32 = arith.constant 0 : i32
    %c0_i32_0 = arith.constant 0 : i32
    %c0_i32_1 = arith.constant 0 : i32
    return %c0_i32, %c0_i32_0 : i32, i32
  }
  func.func @transform_8(%arg0: i32) -> (i32, i32) {
    %c0_i32 = arith.constant 0 : i32
    %c0_i32_0 = arith.constant 0 : i32
    %c0_i32_1 = arith.constant 0 : i32
    return %c0_i32, %c0_i32_0 : i32, i32
  }
  func.func @transform_9(%arg0: i32) -> (i32, i32) {
    %c0_i32 = arith.constant 0 : i32
    %c0_i32_0 = arith.constant 0 : i32
    %c0_i32_1 = arith.constant 0 : i32
    return %c0_i32, %c0_i32_0 : i32, i32
  }
  func.func @transform_10(%arg0: i32) -> (i32, i32) {
    %c0_i32 = arith.constant 0 : i32
    %c0_i32_0 = arith.constant 0 : i32
    return %arg0, %c0_i32 : i32, i32
  }
}

</mosaic_0001>

<llo_original>
// kernel: tpu_custom_call.1
$region0: #{tpu_custom_call.1}
  #allocation0 [shape = 'u32[]', space=smem, size = 0x4, offset = 0x4, fixed_abs, tag = 'smem constant byte address 0x4 - core index']
  #allocation1 [shape = 'u32[72,128]{1,0:T(1,128)}', space=vmem, size = 0x9000, scoped, tag = 'internal scratch']
  %s0 = inlined_call_operand.hbm [shape: f32[8,24], index: 0, kind: input, shape index: {}]
  %s1 = inlined_call_operand.hbm [shape: f32[8,8], index: 1, kind: input, shape index: {}]
  %s2 = inlined_call_operand.hbm [shape: bf16[32,512], index: 2, kind: input, shape index: {}]
  %s3 = inlined_call_operand.hbm [shape: f32[1,512], index: 3, kind: input, shape index: {}]
  %s4 = inlined_call_operand.hbm [shape: bf16[256,256], index: 4, kind: input, shape index: {}]
  %s5 = inlined_call_operand.vmem [shape: f32[1,256], index: 5, kind: input, shape index: {}]
  %s6 = inlined_call_operand.hbm [shape: bf16[256,256], index: 6, kind: input, shape index: {}]
  %s7 = inlined_call_operand.hbm [shape: f32[1,256], index: 7, kind: input, shape index: {}]
  %s8 = inlined_call_operand.vmem [shape: f32[2,256], index: 8, kind: input, shape index: {}]
  %s9 = inlined_call_operand.vmem [shape: f32[1,2], index: 9, kind: input, shape index: {}]
  %s10 = inlined_call_operand.vmem [shape: f32[8,2], index: 10, kind: output, shape index: {}]
  %s11 = sld [smem:[#allocation0]]
  $region78: #{tpu_custom_call.1} parent=0
    _
  %s13 = ssub.s32 1, %s11
  %s14 = scalar_select 0, %s13, %s11
  $region1: #{tpu_custom_call.1} parent=0
    #allocation2 [shape = 'u8[4096]{0}', space=vmem, size = 0x1000, scoped, tag = 'input window, operand 0, single buffered']
    #allocation3 [shape = 's32[1]{0}', space=sflag, size = 0x4, scoped, tag = 'scoped memory for tpu_custom_call.1']
    #allocation4 [shape = 'u8[4096]{0}', space=vmem, size = 0x1000, scoped, tag = 'input window, operand 1, single buffered']
    #allocation5 [shape = 's32[1]{0}', space=sflag, size = 0x4, scoped, tag = 'scoped memory for tpu_custom_call.1']
    #allocation6 [shape = 'u8[32768]{0}', space=vmem, size = 0x8000, scoped, tag = 'input window, operand 2, single buffered']
    #allocation7 [shape = 'u8[2048]{0}', space=vmem, size = 0x800, scoped, tag = 'input window, operand 3, single buffered']
    #allocation8 [shape = 's32[1]{0}', space=sflag, size = 0x4, scoped, tag = 'scoped memory for tpu_custom_call.1']
    #allocation9 [shape = 'u8[131072]{0}', space=vmem, size = 0x20000, scoped, tag = 'input window, operand 4, single buffered']
    #allocation10 [shape = 'u8[131072]{0}', space=vmem, size = 0x20000, scoped, tag = 'input window, operand 6, single buffered']
    #allocation11 [shape = 's32[1]{0}', space=sflag, size = 0x4, scoped, tag = 'scoped memory for tpu_custom_call.1']
    #allocation12 [shape = 'u8[1024]{0}', space=vmem, size = 0x400, scoped, tag = 'input window, operand 7, single buffered']
    %15 = vsyncpa [#allocation3], 0
    %16 = vsyncpa [#allocation5], 0
    %17 = vsyncpa [#allocation8], 0
    %18 = vsyncpa [#allocation11], 0
    // Predicated region
    $region2: #{tpu_custom_call.1} parent=1 // pred_check
      _
    $region3: #{tpu_custom_call.1} parent=1 // pred_check_branch
      %20 = sbr.rel (0) target = $region5
    $region4: #{tpu_custom_call.1} parent=1 // pred_region
      %22 = vsyncadd [#allocation3], 0
      %s24 = sshll.u32 %s0, 4
      %s25 = int_to_ptr.hbm [resolvable:$true] %s24
      %s26 = sshll.u32 [#allocation2], 4
      %s27 = int_to_ptr.vmem [resolvable:$true] %s26
      %29 = dma.hbm_to_vmem [thread:$0]  %s25, 128, %s27, [#allocation3]
    $region5: #{tpu_custom_call.1} parent=1 // pred_fallthru
      _
    // Predicated region
    $region6: #{tpu_custom_call.1} parent=1 // pred_check
      _
    $region7: #{tpu_custom_call.1} parent=1 // pred_check_branch
      %31 = sbr.rel (0) target = $region9
    $region8: #{tpu_custom_call.1} parent=1 // pred_region
      %33 = vsyncadd [#allocation5], 0
      %s35 = sshll.u32 %s1, 4
      %s36 = int_to_ptr.hbm [resolvable:$true] %s35
      %s37 = sshll.u32 [#allocation4], 4
      %s38 = int_to_ptr.vmem [resolvable:$true] %s37
      %40 = dma.hbm_to_vmem [thread:$0]  %s36, 128, %s38, [#allocation5]
    $region9: #{tpu_custom_call.1} parent=1 // pred_fallthru
      _
    // Predicated region
    $region10: #{tpu_custom_call.1} parent=1 // pred_check
      _
    $region11: #{tpu_custom_call.1} parent=1 // pred_check_branch
      %42 = sbr.rel (0) target = $region13
    $region12: #{tpu_custom_call.1} parent=1 // pred_region
      %44 = vsyncadd [#allocation5], 0
      %s45 = sshll.u32 %s2, 4
      %s46 = int_to_ptr.hbm [resolvable:$true] %s45
      %s47 = sshll.u32 [#allocation6], 4
      %s48 = int_to_ptr.vmem [resolvable:$true] %s47
      %53 = dma.hbm_to_vmem [thread:$0]  %s46, 1024, %s48, [#allocation5], 256, 256, 16
    $region13: #{tpu_custom_call.1} parent=1 // pred_fallthru
      _
    // Predicated region
    $region14: #{tpu_custom_call.1} parent=1 // pred_check
      _
    $region15: #{tpu_custom_call.1} parent=1 // pred_check_branch
      %55 = sbr.rel (0) target = $region17
    $region16: #{tpu_custom_call.1} parent=1 // pred_region
      %57 = vsyncadd [#allocation8], 0
      %s59 = sshll.u32 %s3, 4
      %s60 = int_to_ptr.hbm [resolvable:$true] %s59
      %s61 = sshll.u32 [#allocation7], 4
      %s62 = int_to_ptr.vmem [resolvable:$true] %s61
      %64 = dma.hbm_to_vmem [thread:$0]  %s60, 64, %s62, [#allocation8]
    $region17: #{tpu_custom_call.1} parent=1 // pred_fallthru
      _
    // Predicated region
    $region18: #{tpu_custom_call.1} parent=1 // pred_check
      _
    $region19: #{tpu_custom_call.1} parent=1 // pred_check_branch
      %66 = sbr.rel (0) target = $region21
    $region20: #{tpu_custom_call.1} parent=1 // pred_region
      %68 = vsyncadd [#allocation8], 0
      %s69 = sshll.u32 %s4, 4
      %s70 = int_to_ptr.hbm [resolvable:$true] %s69
      %s71 = sshll.u32 [#allocation9], 4
      %s72 = int_to_ptr.vmem [resolvable:$true] %s71
      %77 = dma.hbm_to_vmem [thread:$0]  %s70, 4096, %s72, [#allocation8], 128, 128, 8
    $region21: #{tpu_custom_call.1} parent=1 // pred_fallthru
      _
    // Predicated region
    $region22: #{tpu_custom_call.1} parent=1 // pred_check
      _
    $region23: #{tpu_custom_call.1} parent=1 // pred_check_branch
      %79 = sbr.rel (0) target = $region25
    $region24: #{tpu_custom_call.1} parent=1 // pred_region
      _
    $region25: #{tpu_custom_call.1} parent=1 // pred_fallthru
      _
    // Predicated region
    $region26: #{tpu_custom_call.1} parent=1 // pred_check
      _
    $region27: #{tpu_custom_call.1} parent=1 // pred_check_branch
      %81 = sbr.rel (0) target = $region29
    $region28: #{tpu_custom_call.1} parent=1 // pred_region
      %83 = vsyncadd [#allocation11], 0
      %s84 = sshll.u32 %s6, 4
      %s85 = int_to_ptr.hbm [resolvable:$true] %s84
      %s86 = sshll.u32 [#allocation10], 4
      %s87 = int_to_ptr.vmem [resolvable:$true] %s86
      %92 = dma.hbm_to_vmem [thread:$0]  %s85, 4096, %s87, [#allocation11], 128, 128, 8
    $region29: #{tpu_custom_call.1} parent=1 // pred_fallthru
      _
    // Predicated region
    $region30: #{tpu_custom_call.1} parent=1 // pred_check
      _
    $region31: #{tpu_custom_call.1} parent=1 // pred_check_branch
      %94 = sbr.rel (0) target = $region33
    $region32: #{tpu_custom_call.1} parent=1 // pred_region
      %96 = vsyncadd [#allocation11], 0
      %s98 = sshll.u32 %s7, 4
      %s99 = int_to_ptr.hbm [resolvable:$true] %s98
      %s100 = sshll.u32 [#allocation12], 4
      %s101 = int_to_ptr.vmem [resolvable:$true] %s100
      %103 = dma.hbm_to_vmem [thread:$0]  %s99, 32, %s101, [#allocation11]
    $region33: #{tpu_custom_call.1} parent=1 // pred_fallthru
      _
    // Predicated region
    $region34: #{tpu_custom_call.1} parent=1 // pred_check
      _
    $region35: #{tpu_custom_call.1} parent=1 // pred_check_branch
      %105 = sbr.rel (0) target = $region37
    $region36: #{tpu_custom_call.1} parent=1 // pred_region
      _
    $region37: #{tpu_custom_call.1} parent=1 // pred_fallthru
      _
    // Predicated region
    $region38: #{tpu_custom_call.1} parent=1 // pred_check
      _
    $region39: #{tpu_custom_call.1} parent=1 // pred_check_branch
      %107 = sbr.rel (0) target = $region41
    $region40: #{tpu_custom_call.1} parent=1 // pred_region
      _
    $region41: #{tpu_custom_call.1} parent=1 // pred_fallthru
      _
    // Predicated region
    $region42: #{tpu_custom_call.1} parent=1 // pred_check
      _
    $region43: #{tpu_custom_call.1} parent=1 // pred_check_branch
      %109 = sbr.rel (0) target = $region45
    $region44: #{tpu_custom_call.1} parent=1 // pred_region
      %111 = dma.done [#allocation3], 128
    $region45: #{tpu_custom_call.1} parent=1 // pred_fallthru
      _
    // Predicated region
    $region46: #{tpu_custom_call.1} parent=1 // pred_check
      _
    $region47: #{tpu_custom_call.1} parent=1 // pred_check_branch
      %113 = sbr.rel (0) target = $region49
    $region48: #{tpu_custom_call.1} parent=1 // pred_region
      %115 = dma.done [#allocation5], 128
    $region49: #{tpu_custom_call.1} parent=1 // pred_fallthru
      _
    // Predicated region
    $region50: #{tpu_custom_call.1} parent=1 // pred_check
      _
    $region51: #{tpu_custom_call.1} parent=1 // pred_check_branch
      %117 = sbr.rel (0) target = $region53
    $region52: #{tpu_custom_call.1} parent=1 // pred_region
      %119 = dma.done [#allocation5], 1024
    $region53: #{tpu_custom_call.1} parent=1 // pred_fallthru
      _
    // Predicated region
    $region54: #{tpu_custom_call.1} parent=1 // pred_check
      _
    $region55: #{tpu_custom_call.1} parent=1 // pred_check_branch
      %121 = sbr.rel (0) target = $region57
    $region56: #{tpu_custom_call.1} parent=1 // pred_region
      %123 = dma.done [#allocation8], 64
    $region57: #{tpu_custom_call.1} parent=1 // pred_fallthru
      _
    // Predicated region
    $region58: #{tpu_custom_call.1} parent=1 // pred_check
      _
    $region59: #{tpu_custom_call.1} parent=1 // pred_check_branch
      %125 = sbr.rel (0) target = $region61
    $region60: #{tpu_custom_call.1} parent=1 // pred_region
      %127 = dma.done [#allocation8], 4096
    $region61: #{tpu_custom_call.1} parent=1 // pred_fallthru
      _
    // Predicated region
    $region62: #{tpu_custom_call.1} parent=1 // pred_check
      _
    $region63: #{tpu_custom_call.1} parent=1 // pred_check_branch
      %129 = sbr.rel (0) target = $region65
    $region64: #{tpu_custom_call.1} parent=1 // pred_region
      %131 = dma.done [#allocation11], 4096
    $region65: #{tpu_custom_call.1} parent=1 // pred_fallthru
      _
    // Predicated region
    $region66: #{tpu_custom_call.1} parent=1 // pred_check
      _
    $region67: #{tpu_custom_call.1} parent=1 // pred_check_branch
      %133 = sbr.rel (0) target = $region69
    $region68: #{tpu_custom_call.1} parent=1 // pred_region
      %135 = dma.done [#allocation11], 32
    $region69: #{tpu_custom_call.1} parent=1 // pred_fallthru
      _
    %v137 = vld [vmem:[#allocation2] sm:$0xff]
    %v138 = vpack.c.bf16 %v137, %v137
    %v139 = vld [vmem:[#allocation4] sm:$0xff]
    %v140 = vpack.c.bf16 %v139, %v139
    %v142 = vunpack.c.l.b16 %v140
    %v143 = vpack.c.b16 %v142, %v142
    %144 = vrot.lane.b32.xlu0 %v143, 24
    %v145 = vpop.permute.xlu0 %144
    %vm146 = vcmask 195584
    %v149 = vsel %vm146, %v138, %v145
    %v150 = vld [vmem:[#allocation6] sm:$0xff]
    %v151 = vld [vmem:[#allocation6 + $0x8] sm:$0xff]
    %v152 = vld [vmem:[#allocation6 + $0x10] sm:$0xff]
    %v153 = vld [vmem:[#allocation6 + $0x18] sm:$0xff]
    %v154 = vld [vmem:[#allocation6 + $0x20] sm:$0xff]
    %v155 = vld [vmem:[#allocation6 + $0x28] sm:$0xff]
    %v156 = vld [vmem:[#allocation6 + $0x30] sm:$0xff]
    %v157 = vld [vmem:[#allocation6 + $0x38] sm:$0xff]
    %v158 = vld [vmem:[#allocation7] sm:$0xf]
    %v160 = vperm.slane %v158, 0
    %v161 = vperm.slane %v158, 1
    %v162 = vperm.slane %v158, 2
    %v163 = vperm.slane %v158, 3
    %v176 = vunpack.c.l.b16 %v150
    %v177 = vunpack.c.h.b16 %v150
    %v178 = vunpack.c.l.b16 %v151
    %v179 = vunpack.c.h.b16 %v151
    %v180 = vunpack.c.l.b16 %v152
    %v181 = vunpack.c.h.b16 %v152
    %v182 = vunpack.c.l.b16 %v153
    %v183 = vunpack.c.h.b16 %v153
    %v184 = vunpack.c.l.b16 %v154
    %v185 = vunpack.c.h.b16 %v154
    %v186 = vunpack.c.l.b16 %v155
    %v187 = vunpack.c.h.b16 %v155
    %v188 = vunpack.c.l.b16 %v156
    %v189 = vunpack.c.h.b16 %v156
    %v190 = vunpack.c.l.b16 %v157
    %v191 = vunpack.c.h.b16 %v157
    %v192 = vpack.c.b16 %v180, %v176
    %v193 = vpack.c.b16 %v181, %v177
    %v194 = vpack.c.b16 %v182, %v178
    %v195 = vpack.c.b16 %v183, %v179
    %v196 = vpack.c.b16 %v188, %v184
    %v197 = vpack.c.b16 %v189, %v185
    %v198 = vpack.c.b16 %v190, %v186
    %v199 = vpack.c.b16 %v191, %v187
    %vm208 = vcmask 261120
    %v209 = vsel %vm208, %v149, 0
    %211 = vmatpush.bf16.msra.mxu0 0
    %212 = vmatpush.bf16.msra.mxu0 0
    %213 = vmatpush.bf16.msra.mxu0 0
    %214 = vmatpush.bf16.msra.mxu0 0
    %215 = vmatpush.bf16.msra.mxu0 0
    %216 = vmatpush.bf16.msra.mxu0 0
    %217 = vmatpush.bf16.msra.mxu0 %v196
    %218 = vmatpush.bf16.msra.mxu0 %v192
    %219 = vmatmul.bf16.gmra.mxu0 %v209
    %v220 = vpop.f32.mrf.mxu0
    %v221 = vadd.f32 %v160, %v220
    %v222 = vpop.f32.mrf.mxu0
    %223 = vdwg.mxu0
    %224 = vmatpush.bf16.msra.mxu0 0
    %225 = vmatpush.bf16.msra.mxu0 0
    %226 = vmatpush.bf16.msra.mxu0 0
    %227 = vmatpush.bf16.msra.mxu0 0
    %228 = vmatpush.bf16.msra.mxu0 0
    %229 = vmatpush.bf16.msra.mxu0 0
    %230 = vmatpush.bf16.msra.mxu0 %v197
    %231 = vmatpush.bf16.msra.mxu0 %v193
    %232 = vmatmul.bf16.gmra.mxu0 %v209
    %v233 = vpop.f32.mrf.mxu0
    %v234 = vadd.f32 %v161, %v233
    %v235 = vpop.f32.mrf.mxu0
    %236 = vdwg.mxu0
    %237 = vmatpush.bf16.msra.mxu0 0
    %238 = vmatpush.bf16.msra.mxu0 0
    %239 = vmatpush.bf16.msra.mxu0 0
    %240 = vmatpush.bf16.msra.mxu0 0
    %241 = vmatpush.bf16.msra.mxu0 0
    %242 = vmatpush.bf16.msra.mxu0 0
    %243 = vmatpush.bf16.msra.mxu0 %v198
    %244 = vmatpush.bf16.msra.mxu0 %v194
    %245 = vmatmul.bf16.gmra.mxu0 %v209
    %v246 = vpop.f32.mrf.mxu0
    %v247 = vadd.f32 %v162, %v246
    %v248 = vpop.f32.mrf.mxu0
    %249 = vdwg.mxu0
    %250 = vmatpush.bf16.msra.mxu0 0
    %251 = vmatpush.bf16.msra.mxu0 0
    %252 = vmatpush.bf16.msra.mxu0 0
    %253 = vmatpush.bf16.msra.mxu0 0
    %254 = vmatpush.bf16.msra.mxu0 0
    %255 = vmatpush.bf16.msra.mxu0 0
    %256 = vmatpush.bf16.msra.mxu0 %v199
    %257 = vmatpush.bf16.msra.mxu0 %v195
    %258 = vmatmul.bf16.gmra.mxu0 %v209
    %v259 = vpop.f32.mrf.mxu0
    %v260 = vadd.f32 %v163, %v259
    %v261 = vpop.f32.mrf.mxu0
    %262 = vdwg.mxu0
    %v263 = vmax.f32 %v221, 0.0
    %v264 = vmax.f32 %v234, 0.0
    %v265 = vmax.f32 %v247, 0.0
    %v266 = vmax.f32 %v260, 0.0
    %v267 = vpack.c.bf16 %v263, %v263
    %v268 = vpack.c.bf16 %v264, %v264
    %v269 = vpack.c.bf16 %v265, %v265
    %v270 = vpack.c.bf16 %v266, %v266
    %v271 = vld [vmem:[#allocation9] sm:$0xff]
    %v272 = vld [vmem:[#allocation9 + $0x8] sm:$0xff]
    %v273 = vld [vmem:[#allocation9 + $0x10] sm:$0xff]
    %v274 = vld [vmem:[#allocation9 + $0x18] sm:$0xff]
    %v275 = vld [vmem:[#allocation9 + $0x20] sm:$0xff]
    %v276 = vld [vmem:[#allocation9 + $0x28] sm:$0xff]
    %v277 = vld [vmem:[#allocation9 + $0x30] sm:$0xff]
    %v278 = vld [vmem:[#allocation9 + $0x38] sm:$0xff]
    %v279 = vld [vmem:[#allocation9 + $0x40] sm:$0xff]
    %v280 = vld [vmem:[#allocation9 + $0x48] sm:$0xff]
    %v281 = vld [vmem:[#allocation9 + $0x50] sm:$0xff]
    %v282 = vld [vmem:[#allocation9 + $0x58] sm:$0xff]
    %v283 = vld [vmem:[#allocation9 + $0x60] sm:$0xff]
    %v284 = vld [vmem:[#allocation9 + $0x68] sm:$0xff]
    %v285 = vld [vmem:[#allocation9 + $0x70] sm:$0xff]
    %v286 = vld [vmem:[#allocation9 + $0x78] sm:$0xff]
    %v287 = vld [vmem:[#allocation9 + $0x80] sm:$0xff]
    %v288 = vld [vmem:[#allocation9 + $0x88] sm:$0xff]
    %v289 = vld [vmem:[#allocation9 + $0x90] sm:$0xff]
    %v290 = vld [vmem:[#allocation9 + $0x98] sm:$0xff]
    %v291 = vld [vmem:[#allocation9 + $0xa0] sm:$0xff]
    %v292 = vld [vmem:[#allocation9 + $0xa8] sm:$0xff]
    %v293 = vld [vmem:[#allocation9 + $0xb0] sm:$0xff]
    %v294 = vld [vmem:[#allocation9 + $0xb8] sm:$0xff]
    %v295 = vld [vmem:[#allocation9 + $0xc0] sm:$0xff]
    %v296 = vld [vmem:[#allocation9 + $0xc8] sm:$0xff]
    %v297 = vld [vmem:[#allocation9 + $0xd0] sm:$0xff]
    %v298 = vld [vmem:[#allocation9 + $0xd8] sm:$0xff]
    %v299 = vld [vmem:[#allocation9 + $0xe0] sm:$0xff]
    %v300 = vld [vmem:[#allocation9 + $0xe8] sm:$0xff]
    %v301 = vld [vmem:[#allocation9 + $0xf0] sm:$0xff]
    %v302 = vld [vmem:[#allocation9 + $0xf8] sm:$0xff]
    %v303 = vld [vmem:[%s5] sm:$0x3]
    %v305 = vperm.slane %v303, 0
    %v306 = vperm.slane %v303, 1
    %v341 = vunpack.c.l.b16 %v271
    %v342 = vunpack.c.h.b16 %v271
    %v343 = vunpack.c.l.b16 %v272
    %v344 = vunpack.c.h.b16 %v272
    %v345 = vunpack.c.l.b16 %v273
    %v346 = vunpack.c.h.b16 %v273
    %v347 = vunpack.c.l.b16 %v274
    %v348 = vunpack.c.h.b16 %v274
    %v349 = vunpack.c.l.b16 %v275
    %v350 = vunpack.c.h.b16 %v275
    %v351 = vunpack.c.l.b16 %v276
    %v352 = vunpack.c.h.b16 %v276
    %v353 = vunpack.c.l.b16 %v277
    %v354 = vunpack.c.h.b16 %v277
    %v355 = vunpack.c.l.b16 %v278
    %v356 = vunpack.c.h.b16 %v278
    %v357 = vunpack.c.l.b16 %v279
    %v358 = vunpack.c.h.b16 %v279
    %v359 = vunpack.c.l.b16 %v280
    %v360 = vunpack.c.h.b16 %v280
    %v361 = vunpack.c.l.b16 %v281
    %v362 = vunpack.c.h.b16 %v281
    %v363 = vunpack.c.l.b16 %v282
    %v364 = vunpack.c.h.b16 %v282
    %v365 = vunpack.c.l.b16 %v283
    %v366 = vunpack.c.h.b16 %v283
    %v367 = vunpack.c.l.b16 %v284
    %v368 = vunpack.c.h.b16 %v284
    %v369 = vunpack.c.l.b16 %v285
    %v370 = vunpack.c.h.b16 %v285
    %v371 = vunpack.c.l.b16 %v286
    %v372 = vunpack.c.h.b16 %v286
    %v373 = vunpack.c.l.b16 %v287
    %v374 = vunpack.c.h.b16 %v287
    %v375 = vunpack.c.l.b16 %v288
    %v376 = vunpack.c.h.b16 %v288
    %v377 = vunpack.c.l.b16 %v289
    %v378 = vunpack.c.h.b16 %v289
    %v379 = vunpack.c.l.b16 %v290
    %v380 = vunpack.c.h.b16 %v290
    %v381 = vunpack.c.l.b16 %v291
    %v382 = vunpack.c.h.b16 %v291
    %v383 = vunpack.c.l.b16 %v292
    %v384 = vunpack.c.h.b16 %v292
    %v385 = vunpack.c.l.b16 %v293
    %v386 = vunpack.c.h.b16 %v293
    %v387 = vunpack.c.l.b16 %v294
    %v388 = vunpack.c.h.b16 %v294
    %v389 = vunpack.c.l.b16 %v295
    %v390 = vunpack.c.h.b16 %v295
    %v391 = vunpack.c.l.b16 %v296
    %v392 = vunpack.c.h.b16 %v296
    %v393 = vunpack.c.l.b16 %v297
    %v394 = vunpack.c.h.b16 %v297
    %v395 = vunpack.c.l.b16 %v298
    %v396 = vunpack.c.h.b16 %v298
    %v397 = vunpack.c.l.b16 %v299
    %v398 = vunpack.c.h.b16 %v299
    %v399 = vunpack.c.l.b16 %v300
    %v400 = vunpack.c.h.b16 %v300
    %v401 = vunpack.c.l.b16 %v301
    %v402 = vunpack.c.h.b16 %v301
    %v403 = vunpack.c.l.b16 %v302
    %v404 = vunpack.c.h.b16 %v302
    %v405 = vpack.c.b16 %v343, %v341
    %v406 = vpack.c.b16 %v344, %v342
    %v407 = vpack.c.b16 %v347, %v345
    %v408 = vpack.c.b16 %v348, %v346
    %v409 = vpack.c.b16 %v351, %v349
    %v410 = vpack.c.b16 %v352, %v350
    %v411 = vpack.c.b16 %v355, %v353
    %v412 = vpack.c.b16 %v356, %v354
    %v413 = vpack.c.b16 %v359, %v357
    %v414 = vpack.c.b16 %v360, %v358
    %v415 = vpack.c.b16 %v363, %v361
    %v416 = vpack.c.b16 %v364, %v362
    %v417 = vpack.c.b16 %v367, %v365
    %v418 = vpack.c.b16 %v368, %v366
    %v419 = vpack.c.b16 %v371, %v369
    %v420 = vpack.c.b16 %v372, %v370
    %v421 = vpack.c.b16 %v375, %v373
    %v422 = vpack.c.b16 %v376, %v374
    %v423 = vpack.c.b16 %v379, %v377
    %v424 = vpack.c.b16 %v380, %v378
    %v425 = vpack.c.b16 %v383, %v381
    %v426 = vpack.c.b16 %v384, %v382
    %v427 = vpack.c.b16 %v387, %v385
    %v428 = vpack.c.b16 %v388, %v386
    %v429 = vpack.c.b16 %v391, %v389
    %v430 = vpack.c.b16 %v392, %v390
    %v431 = vpack.c.b16 %v395, %v393
    %v432 = vpack.c.b16 %v396, %v394
    %v433 = vpack.c.b16 %v399, %v397
    %v434 = vpack.c.b16 %v400, %v398
    %v435 = vpack.c.b16 %v403, %v401
    %v436 = vpack.c.b16 %v404, %v402
    %469 = vmatpush.bf16.msra.mxu0 %v419
    %470 = vmatpush.bf16.msra.mxu0 %v417
    %471 = vmatpush.bf16.msra.mxu0 %v415
    %472 = vmatpush.bf16.msra.mxu0 %v413
    %473 = vmatpush.bf16.msra.mxu0 %v411
    %474 = vmatpush.bf16.msra.mxu0 %v409
    %475 = vmatpush.bf16.msra.mxu0 %v407
    %476 = vmatpush.bf16.msra.mxu0 %v405
    %477 = vmatmul.bf16.gmra.mxu0 %v267
    %v478 = vpop.f32.mrf.mxu0
    %v479 = vadd.f32 %v305, %v478
    %v480 = vpop.f32.mrf.mxu0
    %481 = vdwg.mxu0
    %482 = vmatpush.bf16.msra.mxu0 %v435
    %483 = vmatpush.bf16.msra.mxu0 %v433
    %484 = vmatpush.bf16.msra.mxu0 %v431
    %485 = vmatpush.bf16.msra.mxu0 %v429
    %486 = vmatpush.bf16.msra.mxu0 %v427
    %487 = vmatpush.bf16.msra.mxu0 %v425
    %488 = vmatpush.bf16.msra.mxu0 %v423
    %489 = vmatpush.bf16.msra.mxu0 %v421
    %490 = vmatmul.bf16.gmra.mxu0 %v268
    %v491 = vpop.f32.mrf.mxu0
    %v492 = vadd.f32 %v479, %v491
    %v493 = vpop.f32.mrf.mxu0
    %494 = vdwg.mxu0
    %495 = vmatpush.bf16.msra.mxu0 %v420
    %496 = vmatpush.bf16.msra.mxu0 %v418
    %497 = vmatpush.bf16.msra.mxu0 %v416
    %498 = vmatpush.bf16.msra.mxu0 %v414
    %499 = vmatpush.bf16.msra.mxu0 %v412
    %500 = vmatpush.bf16.msra.mxu0 %v410
    %501 = vmatpush.bf16.msra.mxu0 %v408
    %502 = vmatpush.bf16.msra.mxu0 %v406
    %503 = vmatmul.bf16.gmra.mxu0 %v267
    %v504 = vpop.f32.mrf.mxu0
    %v505 = vadd.f32 %v306, %v504
    %v506 = vpop.f32.mrf.mxu0
    %507 = vdwg.mxu0
    %508 = vmatpush.bf16.msra.mxu0 %v436
    %509 = vmatpush.bf16.msra.mxu0 %v434
    %510 = vmatpush.bf16.msra.mxu0 %v432
    %511 = vmatpush.bf16.msra.mxu0 %v430
    %512 = vmatpush.bf16.msra.mxu0 %v428
    %513 = vmatpush.bf16.msra.mxu0 %v426
    %514 = vmatpush.bf16.msra.mxu0 %v424
    %515 = vmatpush.bf16.msra.mxu0 %v422
    %516 = vmatmul.bf16.gmra.mxu0 %v268
    %v517 = vpop.f32.mrf.mxu0
    %v518 = vadd.f32 %v505, %v517
    %v519 = vpop.f32.mrf.mxu0
    %520 = vdwg.mxu0
    %v521 = vmax.f32 %v492, 0.0
    %v522 = vmax.f32 %v518, 0.0
    %v523 = vld [vmem:[#allocation10] sm:$0xff]
    %v524 = vld [vmem:[#allocation10 + $0x8] sm:$0xff]
    %v525 = vld [vmem:[#allocation10 + $0x10] sm:$0xff]
    %v526 = vld [vmem:[#allocation10 + $0x18] sm:$0xff]
    %v527 = vld [vmem:[#allocation10 + $0x20] sm:$0xff]
    %v528 = vld [vmem:[#allocation10 + $0x28] sm:$0xff]
    %v529 = vld [vmem:[#allocation10 + $0x30] sm:$0xff]
    %v530 = vld [vmem:[#allocation10 + $0x38] sm:$0xff]
    %v531 = vld [vmem:[#allocation10 + $0x40] sm:$0xff]
    %v532 = vld [vmem:[#allocation10 + $0x48] sm:$0xff]
    %v533 = vld [vmem:[#allocation10 + $0x50] sm:$0xff]
    %v534 = vld [vmem:[#allocation10 + $0x58] sm:$0xff]
    %v535 = vld [vmem:[#allocation10 + $0x60] sm:$0xff]
    %v536 = vld [vmem:[#allocation10 + $0x68] sm:$0xff]
    %v537 = vld [vmem:[#allocation10 + $0x70] sm:$0xff]
    %v538 = vld [vmem:[#allocation10 + $0x78] sm:$0xff]
    %v539 = vld [vmem:[#allocation10 + $0x80] sm:$0xff]
    %v540 = vld [vmem:[#allocation10 + $0x88] sm:$0xff]
    %v541 = vld [vmem:[#allocation10 + $0x90] sm:$0xff]
    %v542 = vld [vmem:[#allocation10 + $0x98] sm:$0xff]
    %v543 = vld [vmem:[#allocation10 + $0xa0] sm:$0xff]
    %v544 = vld [vmem:[#allocation10 + $0xa8] sm:$0xff]
    %v545 = vld [vmem:[#allocation10 + $0xb0] sm:$0xff]
    %v546 = vld [vmem:[#allocation10 + $0xb8] sm:$0xff]
    %v547 = vld [vmem:[#allocation10 + $0xc0] sm:$0xff]
    %v548 = vld [vmem:[#allocation10 + $0xc8] sm:$0xff]
    %v549 = vld [vmem:[#allocation10 + $0xd0] sm:$0xff]
    %v550 = vld [vmem:[#allocation10 + $0xd8] sm:$0xff]
    %v551 = vld [vmem:[#allocation10 + $0xe0] sm:$0xff]
    %v552 = vld [vmem:[#allocation10 + $0xe8] sm:$0xff]
    %v553 = vld [vmem:[#allocation10 + $0xf0] sm:$0xff]
    %v554 = vld [vmem:[#allocation10 + $0xf8] sm:$0xff]
    %v555 = vld [vmem:[#allocation12] sm:$0x3]
    %v557 = vperm.slane %v555, 0
    %v558 = vperm.slane %v555, 1
    %v593 = vunpack.c.l.b16 %v523
    %v594 = vunpack.c.h.b16 %v523
    %v595 = vunpack.c.l.b16 %v524
    %v596 = vunpack.c.h.b16 %v524
    %v597 = vunpack.c.l.b16 %v525
    %v598 = vunpack.c.h.b16 %v525
    %v599 = vunpack.c.l.b16 %v526
    %v600 = vunpack.c.h.b16 %v526
    %v601 = vunpack.c.l.b16 %v527
    %v602 = vunpack.c.h.b16 %v527
    %v603 = vunpack.c.l.b16 %v528
    %v604 = vunpack.c.h.b16 %v528
    %v605 = vunpack.c.l.b16 %v529
    %v606 = vunpack.c.h.b16 %v529
    %v607 = vunpack.c.l.b16 %v530
    %v608 = vunpack.c.h.b16 %v530
    %v609 = vunpack.c.l.b16 %v531
    %v610 = vunpack.c.h.b16 %v531
    %v611 = vunpack.c.l.b16 %v532
    %v612 = vunpack.c.h.b16 %v532
    %v613 = vunpack.c.l.b16 %v533
    %v614 = vunpack.c.h.b16 %v533
    %v615 = vunpack.c.l.b16 %v534
    %v616 = vunpack.c.h.b16 %v534
    %v617 = vunpack.c.l.b16 %v535
    %v618 = vunpack.c.h.b16 %v535
    %v619 = vunpack.c.l.b16 %v536
    %v620 = vunpack.c.h.b16 %v536
    %v621 = vunpack.c.l.b16 %v537
    %v622 = vunpack.c.h.b16 %v537
    %v623 = vunpack.c.l.b16 %v538
    %v624 = vunpack.c.h.b16 %v538
    %v625 = vunpack.c.l.b16 %v539
    %v626 = vunpack.c.h.b16 %v539
    %v627 = vunpack.c.l.b16 %v540
    %v628 = vunpack.c.h.b16 %v540
    %v629 = vunpack.c.l.b16 %v541
    %v630 = vunpack.c.h.b16 %v541
    %v631 = vunpack.c.l.b16 %v542
    %v632 = vunpack.c.h.b16 %v542
    %v633 = vunpack.c.l.b16 %v543
    %v634 = vunpack.c.h.b16 %v543
    %v635 = vunpack.c.l.b16 %v544
    %v636 = vunpack.c.h.b16 %v544
    %v637 = vunpack.c.l.b16 %v545
    %v638 = vunpack.c.h.b16 %v545
    %v639 = vunpack.c.l.b16 %v546
    %v640 = vunpack.c.h.b16 %v546
    %v641 = vunpack.c.l.b16 %v547
    %v642 = vunpack.c.h.b16 %v547
    %v643 = vunpack.c.l.b16 %v548
    %v644 = vunpack.c.h.b16 %v548
    %v645 = vunpack.c.l.b16 %v549
    %v646 = vunpack.c.h.b16 %v549
    %v647 = vunpack.c.l.b16 %v550
    %v648 = vunpack.c.h.b16 %v550
    %v649 = vunpack.c.l.b16 %v551
    %v650 = vunpack.c.h.b16 %v551
    %v651 = vunpack.c.l.b16 %v552
    %v652 = vunpack.c.h.b16 %v552
    %v653 = vunpack.c.l.b16 %v553
    %v654 = vunpack.c.h.b16 %v553
    %v655 = vunpack.c.l.b16 %v554
    %v656 = vunpack.c.h.b16 %v554
    %v657 = vpack.c.b16 %v595, %v593
    %v658 = vpack.c.b16 %v596, %v594
    %v659 = vpack.c.b16 %v599, %v597
    %v660 = vpack.c.b16 %v600, %v598
    %v661 = vpack.c.b16 %v603, %v601
    %v662 = vpack.c.b16 %v604, %v602
    %v663 = vpack.c.b16 %v607, %v605
    %v664 = vpack.c.b16 %v608, %v606
    %v665 = vpack.c.b16 %v611, %v609
    %v666 = vpack.c.b16 %v612, %v610
    %v667 = vpack.c.b16 %v615, %v613
    %v668 = vpack.c.b16 %v616, %v614
    %v669 = vpack.c.b16 %v619, %v617
    %v670 = vpack.c.b16 %v620, %v618
    %v671 = vpack.c.b16 %v623, %v621
    %v672 = vpack.c.b16 %v624, %v622
    %v673 = vpack.c.b16 %v627, %v625
    %v674 = vpack.c.b16 %v628, %v626
    %v675 = vpack.c.b16 %v631, %v629
    %v676 = vpack.c.b16 %v632, %v630
    %v677 = vpack.c.b16 %v635, %v633
    %v678 = vpack.c.b16 %v636, %v634
    %v679 = vpack.c.b16 %v639, %v637
    %v680 = vpack.c.b16 %v640, %v638
    %v681 = vpack.c.b16 %v643, %v641
    %v682 = vpack.c.b16 %v644, %v642
    %v683 = vpack.c.b16 %v647, %v645
    %v684 = vpack.c.b16 %v648, %v646
    %v685 = vpack.c.b16 %v651, %v649
    %v686 = vpack.c.b16 %v652, %v650
    %v687 = vpack.c.b16 %v655, %v653
    %v688 = vpack.c.b16 %v656, %v654
    %721 = vmatpush.bf16.msra.mxu0 %v671
    %722 = vmatpush.bf16.msra.mxu0 %v669
    %723 = vmatpush.bf16.msra.mxu0 %v667
    %724 = vmatpush.bf16.msra.mxu0 %v665
    %725 = vmatpush.bf16.msra.mxu0 %v663
    %726 = vmatpush.bf16.msra.mxu0 %v661
    %727 = vmatpush.bf16.msra.mxu0 %v659
    %728 = vmatpush.bf16.msra.mxu0 %v657
    %729 = vmatmul.bf16.gmra.mxu0 %v269
    %v730 = vpop.f32.mrf.mxu0
    %v731 = vadd.f32 %v557, %v730
    %v732 = vpop.f32.mrf.mxu0
    %733 = vdwg.mxu0
    %734 = vmatpush.bf16.msra.mxu0 %v687
    %735 = vmatpush.bf16.msra.mxu0 %v685
    %736 = vmatpush.bf16.msra.mxu0 %v683
    %737 = vmatpush.bf16.msra.mxu0 %v681
    %738 = vmatpush.bf16.msra.mxu0 %v679
    %739 = vmatpush.bf16.msra.mxu0 %v677
    %740 = vmatpush.bf16.msra.mxu0 %v675
    %741 = vmatpush.bf16.msra.mxu0 %v673
    %742 = vmatmul.bf16.gmra.mxu0 %v270
    %v743 = vpop.f32.mrf.mxu0
    %v744 = vadd.f32 %v731, %v743
    %v745 = vpop.f32.mrf.mxu0
    %746 = vdwg.mxu0
    %747 = vmatpush.bf16.msra.mxu0 %v672
    %748 = vmatpush.bf16.msra.mxu0 %v670
    %749 = vmatpush.bf16.msra.mxu0 %v668
    %750 = vmatpush.bf16.msra.mxu0 %v666
    %751 = vmatpush.bf16.msra.mxu0 %v664
    %752 = vmatpush.bf16.msra.mxu0 %v662
    %753 = vmatpush.bf16.msra.mxu0 %v660
    %754 = vmatpush.bf16.msra.mxu0 %v658
    %755 = vmatmul.bf16.gmra.mxu0 %v269
    %v756 = vpop.f32.mrf.mxu0
    %v757 = vadd.f32 %v558, %v756
    %v758 = vpop.f32.mrf.mxu0
    %759 = vdwg.mxu0
    %760 = vmatpush.bf16.msra.mxu0 %v688
    %761 = vmatpush.bf16.msra.mxu0 %v686
    %762 = vmatpush.bf16.msra.mxu0 %v684
    %763 = vmatpush.bf16.msra.mxu0 %v682
    %764 = vmatpush.bf16.msra.mxu0 %v680
    %765 = vmatpush.bf16.msra.mxu0 %v678
    %766 = vmatpush.bf16.msra.mxu0 %v676
    %767 = vmatpush.bf16.msra.mxu0 %v674
    %768 = vmatmul.bf16.gmra.mxu0 %v270
    %v769 = vpop.f32.mrf.mxu0
    %v770 = vadd.f32 %v757, %v769
    %v771 = vpop.f32.mrf.mxu0
    %772 = vdwg.mxu0
    %v773 = vmax.f32 %v744, 0.0
    %v774 = vmax.f32 %v770, 0.0
    %v775 = vld [vmem:[%s8] ss:$2 sm:$0x3]
    %s776 = scalar_lea.vmem %s8, 1
    %v777 = vld [vmem:[%s776] ss:$2 sm:$0x3]
    %v779 = vperm.slane %v775, 0
    %v780 = vperm.slane %v775, 1
    %v783 = vmul.f32 %v521, %v779
    %v784 = vmul.f32 %v522, %v780
    %v785 = vadd.f32 %v783, %v784
    %786 = vadd.xlane.f32.xlu0 %v785
    %v787 = vpop.xlane.xlu0 %786
    %v789 = vperm.slane %v777, 0
    %v790 = vperm.slane %v777, 1
    %v793 = vmul.f32 %v773, %v789
    %v794 = vmul.f32 %v774, %v790
    %v795 = vadd.f32 %v793, %v794
    %796 = vadd.xlane.f32.xlu0 %v795
    %v797 = vpop.xlane.xlu0 %796
    %vm798 = vcmask 7168
    %v799 = vsel %vm798, %v787, %v797
    %v800 = vld [vmem:[%s9] sm:$0x1]
    %v802 = vperm.slane %v800, 0
    %v804 = vadd.f32 %v799, %v802
    %vm805 = vcmask 15360
    %806 = vst.msk [vmem:[%s10] sm:$0xff] %vm805, %v804
    // Predicated region
    $region70: #{tpu_custom_call.1} parent=1 // pred_check
      _
    $region71: #{tpu_custom_call.1} parent=1 // pred_check_branch
      %808 = sbr.rel (0) target = $region73
    $region72: #{tpu_custom_call.1} parent=1 // pred_region
      _
    $region73: #{tpu_custom_call.1} parent=1 // pred_fallthru
      _
    // Predicated region
    $region74: #{tpu_custom_call.1} parent=1 // pred_check
      _
    $region75: #{tpu_custom_call.1} parent=1 // pred_check_branch
      %810 = sbr.rel (0) target = $region77
    $region76: #{tpu_custom_call.1} parent=1 // pred_region
      _
    $region77: #{tpu_custom_call.1} parent=1 // pred_fallthru
      _
    %811 = vsyncpa [#allocation3], 1
    %812 = vsyncpa [#allocation5], 1
    %813 = vsyncpa [#allocation8], 1
    %814 = vsyncpa [#allocation11], 1

</llo_original>
